<compile_context>
chip_gen: v5e
topology: v5e:2x2
jax: 0.10.0
libtpu: 0.0.40
codegen_flags: <defaults>
</compile_context>

<pallas_src>
import functools

import jax
import jax.numpy as jnp
from jax import lax
from jax.experimental import pallas as pl
from jax.experimental.pallas import tpu as pltpu


_GROUP = 8                 # rows gathered per aligned (8, D_pad) store
_ONE_HOT_MAX_VOCAB = 1024  # padded-vocab cutoff for the one-hot MXU path
_HBM_INFLIGHT_DMAS = 8     # rotating per-row DMA window in the HBM fallback


def _round_up(x: int, m: int) -> int:
    return (x + m - 1) // m * m


# --------------------------------------------------------------------------
# Kernels
# --------------------------------------------------------------------------
def _embed_onehot_kernel(ids_ref, emb_ref, out_ref):
    """Small-vocab path: the gather is a one-hot matmul on the MXU.

    ids_ref : VMEM (TN, 1) int32    per-tile word ids
    emb_ref : VMEM (V_pad, D_pad)   full table, resident across grid steps
    out_ref : VMEM (TN, D_pad)      dense output tile
    """
    tn = out_ref.shape[0]
    v_pad = emb_ref.shape[0]
    lanes = lax.broadcasted_iota(jnp.int32, (tn, v_pad), 1)
    one_hot = (lanes == ids_ref[...]).astype(emb_ref.dtype)   # exact 0/1 selection
    out_ref[...] = jnp.dot(
        one_hot, emb_ref[...], preferred_element_type=jnp.float32
    ).astype(out_ref.dtype)


def _embed_gather_kernel(ids_ref, emb_ref, out_ref, *, group, unroll):
    """VMEM-resident gather: `group` dynamic-row loads -> one aligned store.

    ids_ref : SMEM (TN,) int32      per-tile word ids (scalar reads)
    emb_ref : VMEM (V_pad, D_pad)   full table, resident across grid steps
    out_ref : VMEM (TN, D_pad)      dense output tile
    """
    num_groups = out_ref.shape[0] // group

    def body(g, carry):
        base = pl.multiple_of(g * group, group)
        # `group` dynamic single-row loads from the resident table ...
        rows = [emb_ref[pl.ds(ids_ref[base + r], 1), :] for r in range(group)]
        # ... written back as ONE aligned (group, D_pad) full-vreg store.
        out_ref[pl.ds(base, group), :] = jnp.concatenate(rows, axis=0)
        return carry

    lax.fori_loop(0, num_groups, body, 0, unroll=unroll)


def _embed_hbm_gather_kernel(ids_ref, emb_hbm, out_ref, sems, *, n_inflight):
    """Large-vocab fallback: per-row DMA gather from the HBM-resident table.

    ids_ref : SMEM (TN,) int32      per-tile word ids
    emb_hbm : ANY  (V, D)           table left in HBM (no VMEM residency)
    out_ref : VMEM (TN, D)          output tile (DMA destination)
    sems    : DMA semaphores (n_inflight,) -- rotating in-flight window
    """
    tn = out_ref.shape[0]

    def body(j, carry):
        slot = j & (n_inflight - 1)

        @pl.when(j >= n_inflight)
        def _():
            # Retire the copy that used this semaphore slot n_inflight rows ago
            # (wait descriptor only needs matching shapes).
            pltpu.make_async_copy(emb_hbm.at[0], out_ref.at[0], sems.at[slot]).wait()

        idx = ids_ref[j]
        pltpu.make_async_copy(emb_hbm.at[idx], out_ref.at[j], sems.at[slot]).start()
        return carry

    lax.fori_loop(0, tn, body, 0)

    def drain(s, carry):
        pltpu.make_async_copy(emb_hbm.at[0], out_ref.at[0], sems.at[s]).wait()
        return carry

    lax.fori_loop(0, n_inflight, drain, 0)


# --------------------------------------------------------------------------
# pallas_call builders
# --------------------------------------------------------------------------
def _resident_pallas_call(kernel, ids, ids_spec, emb, tn, n_pad, d_pad,
                          out_dtype, dim_sem, vmem_limit, single_buffer_table):
    """VMEM-resident-table paths (one-hot / grouped gather)."""
    v_pad = emb.shape[0]
    num_tiles = n_pad // tn
    # Constant block index => the table is DMAed into VMEM once and stays
    # resident.  Single-buffering it halves its VMEM footprint (double
    # buffering a never-changing block is pure waste).
    table_kwargs = {"pipeline_mode": pl.Buffered(1)} if single_buffer_table else {}
    return pl.pallas_call(
        kernel,
        out_shape=jax.ShapeDtypeStruct((n_pad, d_pad), out_dtype),
        grid_spec=pltpu.PrefetchScalarGridSpec(
            num_scalar_prefetch=0,
            grid=(num_tiles,),
            in_specs=[
                ids_spec,
                pl.BlockSpec((v_pad, d_pad), lambda i: (0, 0), **table_kwargs),
            ],
            out_specs=pl.BlockSpec((tn, d_pad), lambda i: (i, 0)),
        ),
        compiler_params=pltpu.CompilerParams(
            dimension_semantics=(dim_sem,),
            vmem_limit_bytes=vmem_limit,
        ),
    )(ids, emb)


# --------------------------------------------------------------------------
# Public wrapper (equivalent of WordEmbeddor.forward)
# --------------------------------------------------------------------------
def word_embeddor_forward(words: jax.Array, chars, embedding_matrix: jax.Array,
                          *, tokens_per_tile: int | None = None,
                          path: str | None = None) -> jax.Array:
    """JAX/Pallas equivalent of WordEmbeddor.forward: embedding_matrix[words].

    :param words: (B, W) integer word ids
    :param chars: unused (kept for signature parity with the PyTorch module)
    :param embedding_matrix: (V, D) pretrained word vectors
    :param tokens_per_tile: override for the token tile size (else auto-sized)
    :param path: force "onehot" / "gather" / "hbm" (else auto-selected)
    :returns: (B, W, D) embeddings
    """
    del chars  # unused by WordEmbeddor, exactly like the PyTorch module
    B, W = words.shape
    V, D = embedding_matrix.shape
    n = B * W
    itemsize = embedding_matrix.dtype.itemsize

    # OOB ids are clamped (PyTorch's nn.Embedding would raise instead).
    flat_ids = jnp.clip(words.reshape(-1).astype(jnp.int32), 0, V - 1)

    # VMEM budget.  NOTE: treated as per-TensorCore capacity and budgeted
    # conservatively, since with a "parallel" grid axis each v7x core holds
    # its own copy of the resident table.
    try:
        vmem_cap = int(pltpu.get_tpu_info().vmem_capacity_bytes)
    except Exception:
        vmem_cap = 64 * 1024 * 1024
    budget = int(vmem_cap * 0.70)

    d_pad = _round_up(D, 128)
    if path is None:
        v_oh = _round_up(V, 128)
        v_g = _round_up(V, _GROUP)
        if v_oh <= _ONE_HOT_MAX_VOCAB and 2 * v_oh * d_pad * itemsize <= budget:
            path = "onehot"
        elif v_g * d_pad * itemsize + 4 * _GROUP * d_pad * itemsize <= budget:
            path = "gather"
        else:
            path = "hbm"

    # ---------------- Large-vocab fallback: table stays in HBM ----------------
    if path == "hbm":
        tn = tokens_per_tile if tokens_per_tile is not None else 512
        tn = min(_round_up(max(tn, _GROUP), _GROUP), _round_up(n, _GROUP))
        n_pad = _round_up(n, tn)
        ids = flat_ids if n_pad == n else jnp.pad(flat_ids, (0, n_pad - n))
        kernel = functools.partial(_embed_hbm_gather_kernel,
                                   n_inflight=_HBM_INFLIGHT_DMAS)
        vmem_limit = min(max(4 * tn * D * itemsize + (4 << 20), 32 << 20), vmem_cap)
        out = pl.pallas_call(
            kernel,
            out_shape=jax.ShapeDtypeStruct((n_pad, D), embedding_matrix.dtype),
            grid_spec=pltpu.PrefetchScalarGridSpec(
                num_scalar_prefetch=0,
                grid=(n_pad // tn,),
                in_specs=[
                    pl.BlockSpec((tn,), lambda i: (i,), memory_space=pltpu.SMEM),
                    pl.BlockSpec(memory_space=pl.ANY),      # table left in HBM
                ],
                out_specs=pl.BlockSpec((tn, D), lambda i: (i, 0)),
                scratch_shapes=[pltpu.SemaphoreType.DMA((_HBM_INFLIGHT_DMAS,))],
            ),
            compiler_params=pltpu.CompilerParams(
                dimension_semantics=("parallel",),
                vmem_limit_bytes=vmem_limit,
            ),
        )(ids, embedding_matrix)
        return out[:n].reshape(B, W, D)

    # ---------------- VMEM-resident table paths ----------------
    v_pad = _round_up(V, 128 if path == "onehot" else _GROUP)
    emb = embedding_matrix
    if (v_pad, d_pad) != (V, D):
        emb = jnp.pad(emb, ((0, v_pad - V), (0, d_pad - D)))
    table_bytes = v_pad * d_pad * itemsize

    # Token tile from leftover VMEM (output tile is double-buffered by the
    # pipeline); bigger tiles amortize the ~0.35us per-grid-step overhead.
    if tokens_per_tile is None:
        leftover = max(budget - table_bytes, 2 * _GROUP * d_pad * itemsize)
        tn = leftover // (2 * d_pad * itemsize)
        tn = min(tn, 256 if path == "onehot" else 1024)
    else:
        tn = tokens_per_tile
    tn = min(_round_up(max(tn, _GROUP), _GROUP), _round_up(n, _GROUP))
    n_pad = _round_up(n, tn)
    ids = flat_ids if n_pad == n else jnp.pad(flat_ids, (0, n_pad - n))

    # v7x megacore: only split token tiles across both TensorCores when the
    # output writeback traffic is at least as large as the (duplicated) table.
    out_bytes = n_pad * d_pad * itemsize
    dim_sem = "parallel" if out_bytes >= table_bytes else "arbitrary"

    out_tile_bytes = tn * d_pad * itemsize
    onehot_bytes = tn * v_pad * itemsize if path == "onehot" else 0
    needed = table_bytes + 2 * out_tile_bytes + onehot_bytes + (2 << 20)
    vmem_limit = min(max(needed, 32 << 20), vmem_cap)

    if path == "onehot":
        kernel = _embed_onehot_kernel
        ids_arr = ids.reshape(n_pad, 1)                      # VMEM (TN,1) block
        ids_spec = pl.BlockSpec((tn, 1), lambda i: (i, 0))
    else:  # "gather"
        kernel = functools.partial(_embed_gather_kernel, group=_GROUP, unroll=2)
        ids_arr = ids                                        # per-tile SMEM block
        ids_spec = pl.BlockSpec((tn,), lambda i: (i,), memory_space=pltpu.SMEM)

    try:
        out = _resident_pallas_call(kernel, ids_arr, ids_spec, emb, tn, n_pad,
                                    d_pad, embedding_matrix.dtype, dim_sem,
                                    vmem_limit, single_buffer_table=True)
    except Exception:
        # pl.Buffered(1) rejected on this jax version -> same kernel with the
        # default double-buffered table (identical semantics, 2x table VMEM).
        out = _resident_pallas_call(kernel, ids_arr, ids_spec, emb, tn, n_pad,
                                    d_pad, embedding_matrix.dtype, dim_sem,
                                    vmem_limit, single_buffer_table=False)

    # NOTE: when D is not a multiple of 128 this slice costs an extra HBM
    # read+write of the output; for 128-aligned D (like the demo) it is free.
    return out[:n, :D].reshape(B, W, D)


# --------------------------------------------------------------------------
# Demo / self-check
# --------------------------------------------------------------------------
if __name__ == "__main__":
    # Deterministic, in-script "pretrained" word vectors (synthetic).
    key = jax.random.PRNGKey(0)
    k_emb, k_words = jax.random.split(key)

    B, W, C = 2, 8, 4          # batch, max_num_words, max_num_chars
    V, D = 64, 128             # vocab size, embedding_dim

    embedding_matrix = jax.random.normal(k_emb, (V, D), dtype=jnp.float32)
    words = jax.random.randint(k_words, (B, W), 0, V, dtype=jnp.int32)
    chars = jnp.zeros((B, W, C), dtype=jnp.int32)  # unused, signature parity

    out = word_embeddor_forward(words, chars, embedding_matrix)
    out = jax.block_until_ready(out)

    # Reference check against plain JAX embedding lookup.
    ref = jnp.take(embedding_matrix, words, axis=0)
    assert out.shape == (B, W, D), out.shape
    assert out.dtype == embedding_matrix.dtype
    assert jnp.allclose(out, ref), "Pallas embedding lookup mismatch vs. reference"

    print("KERNEL_OK")
</pallas_src>

<mosaic_0001>
module attributes {stable_mosaic.version = 11 : i64} {
  func.func @_embed_onehot_kernel(%arg0: i32, %arg1: memref<16x1xi32, #tpu.memory_space<vmem>>, %arg2: memref<128x128xf32, #tpu.memory_space<vmem>>, %arg3: memref<16x128xf32, #tpu.memory_space<vmem>>) attributes {dimension_semantics = [#tpu.dimension_semantics<arbitrary>], iteration_bounds = array<i64: 1>, scalar_prefetch = 0 : i64, scratch_operands = 0 : i64, tpu.core_type = #tpu.core_type<tc>, window_params = [{transform_indices = @transform_0, window_bounds = array<i64: 16, 1>}, {pipeline_mode = #tpu.pipeline_mode<synchronous>, transform_indices = @transform_1, window_bounds = array<i64: 128, 128>}, {transform_indices = @transform_2, window_bounds = array<i64: 16, 128>}]} {
    %0 = tpu.iota {dimensions = array<i32: 1>} : vector<16x128xi32>
    %c0 = arith.constant 0 : index
    %c0_0 = arith.constant 0 : index
    %1 = vector.load %arg1[%c0, %c0_0] : memref<16x1xi32, #tpu.memory_space<vmem>>, vector<16x1xi32>
    %2 = vector.broadcast %1 : vector<16x1xi32> to vector<16x128xi32>
    %3 = arith.cmpi eq, %0, %2 : vector<16x128xi32>
    %4 = arith.extui %3 : vector<16x128xi1> to vector<16x128xi32>
    %5 = arith.sitofp %4 : vector<16x128xi32> to vector<16x128xf32>
    %c0_1 = arith.constant 0 : index
    %c0_2 = arith.constant 0 : index
    %6 = vector.load %arg2[%c0_1, %c0_2] : memref<128x128xf32, #tpu.memory_space<vmem>>, vector<128x128xf32>
    %cst = arith.constant dense<0.000000e+00> : vector<16x128xf32>
    %7 = tpu.matmul %5, %6, %cst {dimension_numbers = #tpu.dot_dimension_numbers<[1], [0], [0], [1], [0, 0, 1, 1], [], []>} : vector<16x128xf32>, vector<128x128xf32>, vector<16x128xf32> -> vector<16x128xf32>
    %c0_3 = arith.constant 0 : index
    %c0_4 = arith.constant 0 : index
    %8 = vector.load %arg3[%c0_3, %c0_4] : memref<16x128xf32, #tpu.memory_space<vmem>>, vector<16x128xf32>
    tpu.vector_store %arg3[%c0_3, %c0_4], %7 {strides = array<i32>} : memref<16x128xf32, #tpu.memory_space<vmem>>, vector<16x128xf32>,
    return
  }
  func.func @transform_0(%arg0: i32) -> (i32, i32) {
    %c0_i32 = arith.constant 0 : i32
    %c0_i32_0 = arith.constant 0 : i32
    return %arg0, %c0_i32 : i32, i32
  }
  func.func @transform_1(%arg0: i32) -> (i32, i32) {
    %c0_i32 = arith.constant 0 : i32
    %c0_i32_0 = arith.constant 0 : i32
    %c0_i32_1 = arith.constant 0 : i32
    return %c0_i32, %c0_i32_0 : i32, i32
  }
  func.func @transform_2(%arg0: i32) -> (i32, i32) {
    %c0_i32 = arith.constant 0 : i32
    %c0_i32_0 = arith.constant 0 : i32
    return %arg0, %c0_i32 : i32, i32
  }
}

module attributes {stable_mosaic.version = 11 : i64} {
  func.func @_embed_onehot_kernel(%arg0: i32, %arg1: memref<16x1xi32, #tpu.memory_space<vmem>>, %arg2: memref<128x128xf32, #tpu.memory_space<vmem>>, %arg3: memref<16x128xf32, #tpu.memory_space<vmem>>) attributes {dimension_semantics = [#tpu.dimension_semantics<arbitrary>], iteration_bounds = array<i64: 1>, scalar_prefetch = 0 : i64, scratch_operands = 0 : i64, tpu.core_type = #tpu.core_type<tc>, window_params = [{transform_indices = @transform_0, window_bounds = array<i64: 16, 1>}, {pipeline_mode = #tpu.pipeline_mode<synchronous>, transform_indices = @transform_1, window_bounds = array<i64: 128, 128>}, {transform_indices = @transform_2, window_bounds = array<i64: 16, 128>}]} {
    %0 = tpu.iota {dimensions = array<i32: 1>} : vector<16x128xi32>
    %c0 = arith.constant 0 : index
    %c0_0 = arith.constant 0 : index
    %1 = vector.load %arg1[%c0, %c0_0] : memref<16x1xi32, #tpu.memory_space<vmem>>, vector<16x1xi32>
    %2 = vector.broadcast %1 : vector<16x1xi32> to vector<16x128xi32>
    %3 = arith.cmpi eq, %0, %2 : vector<16x128xi32>
    %4 = arith.extui %3 : vector<16x128xi1> to vector<16x128xi32>
    %5 = arith.sitofp %4 : vector<16x128xi32> to vector<16x128xf32>
    %c0_1 = arith.constant 0 : index
    %c0_2 = arith.constant 0 : index
    %6 = vector.load %arg2[%c0_1, %c0_2] : memref<128x128xf32, #tpu.memory_space<vmem>>, vector<128x128xf32>
    %cst = arith.constant dense<0.000000e+00> : vector<16x128xf32>
    %7 = tpu.matmul %5, %6, %cst {dimension_numbers = #tpu.dot_dimension_numbers<[1], [0], [0], [1], [0, 0, 1, 1], [], []>} : vector<16x128xf32>, vector<128x128xf32>, vector<16x128xf32> -> vector<16x128xf32>
    %c0_3 = arith.constant 0 : index
    %c0_4 = arith.constant 0 : index
    %8 = vector.load %arg3[%c0_3, %c0_4] : memref<16x128xf32, #tpu.memory_space<vmem>>, vector<16x128xf32>
    tpu.vector_store %arg3[%c0_3, %c0_4], %7 {strides = array<i32>} : memref<16x128xf32, #tpu.memory_space<vmem>>, vector<16x128xf32>,
    return
  }
  func.func @transform_0(%arg0: i32) -> (i32, i32) {
    %c0_i32 = arith.constant 0 : i32
    %c0_i32_0 = arith.constant 0 : i32
    return %arg0, %c0_i32 : i32, i32
  }
  func.func @transform_1(%arg0: i32) -> (i32, i32) {
    %c0_i32 = arith.constant 0 : i32
    %c0_i32_0 = arith.constant 0 : i32
    %c0_i32_1 = arith.constant 0 : i32
    return %c0_i32, %c0_i32_0 : i32, i32
  }
  func.func @transform_2(%arg0: i32) -> (i32, i32) {
    %c0_i32 = arith.constant 0 : i32
    %c0_i32_0 = arith.constant 0 : i32
    return %arg0, %c0_i32 : i32, i32
  }
}

</mosaic_0001>

<llo_original>
// kernel: tpu_custom_call.1
$region0: #{tpu_custom_call.1}
  #allocation0 [shape = 'u32[]', space=smem, size = 0x4, offset = 0x4, fixed_abs, tag = 'smem constant byte address 0x4 - core index']
  #allocation1 [shape = 'u32[72,128]{1,0:T(1,128)}', space=vmem, size = 0x9000, scoped, tag = 'internal scratch']
  %s0 = inlined_call_operand.vmem [shape: s32[16,1], index: 0, kind: input, shape index: {}]
  %s1 = inlined_call_operand.hbm [shape: f32[128,128], index: 1, kind: input, shape index: {}]
  %s2 = inlined_call_operand.hbm [shape: f32[16,128], index: 2, kind: output, shape index: {}]
  %s3 = sld [smem:[#allocation0]]
  $region22: #{tpu_custom_call.1} parent=0
    _
  %s5 = ssub.s32 1, %s3
  %s6 = scalar_select 0, %s5, %s3
  $region1: #{tpu_custom_call.1} parent=0
    #allocation2 [shape = 'u8[65536]{0}', space=vmem, size = 0x10000, scoped, tag = 'input window, operand 1, single buffered']
    #allocation3 [shape = 's32[1]{0}', space=sflag, size = 0x4, scoped, tag = 'scoped memory for tpu_custom_call.1']
    #allocation4 [shape = 's32[1]{0}', space=sflag, size = 0x4, scoped, tag = 'scoped memory for tpu_custom_call.1']
    #allocation5 [shape = 'u8[8192]{0}', space=vmem, size = 0x2000, scoped, tag = 'output window, operand 0, single buffered']
    %7 = vsyncpa [#allocation3], 0
    %8 = vsyncpa [#allocation4], 0
    // Predicated region
    $region2: #{tpu_custom_call.1} parent=1 // pred_check
      _
    $region3: #{tpu_custom_call.1} parent=1 // pred_check_branch
      %10 = sbr.rel (0) target = $region5
    $region4: #{tpu_custom_call.1} parent=1 // pred_region
      _
    $region5: #{tpu_custom_call.1} parent=1 // pred_fallthru
      _
    // Predicated region
    $region6: #{tpu_custom_call.1} parent=1 // pred_check
      _
    $region7: #{tpu_custom_call.1} parent=1 // pred_check_branch
      %12 = sbr.rel (0) target = $region9
    $region8: #{tpu_custom_call.1} parent=1 // pred_region
      %14 = vsyncadd [#allocation3], 0
      %s15 = sshll.u32 %s1, 4
      %s16 = int_to_ptr.hbm [resolvable:$true] %s15
      %s17 = sshll.u32 [#allocation2], 4
      %s18 = int_to_ptr.vmem [resolvable:$true] %s17
      %23 = dma.hbm_to_vmem [thread:$0]  %s16, 2048, %s18, [#allocation3], 128, 128, 8
    $region9: #{tpu_custom_call.1} parent=1 // pred_fallthru
      _
    // Predicated region
    $region10: #{tpu_custom_call.1} parent=1 // pred_check
      _
    $region11: #{tpu_custom_call.1} parent=1 // pred_check_branch
      %25 = sbr.rel (0) target = $region13
    $region12: #{tpu_custom_call.1} parent=1 // pred_region
      %27 = dma.done [#allocation3], 2048
    $region13: #{tpu_custom_call.1} parent=1 // pred_fallthru
      _
    %v28 = vlaneseq
    %v29 = vand.u32 %v28, 127
    %v30 = vld [vmem:[%s0] sm:$0xff]
    %v31 = vld [vmem:[%s0 + $0x8] sm:$0xff]
    %32 = vset.pattern.permute.xlu0 0
    %33 = vperm.xlu0 %32, %v30
    %v34 = vpop.permute.xlu0 %33
    %35 = vset.pattern.permute.xlu0 0
    %36 = vperm.xlu0 %35, %v31
    %v37 = vpop.permute.xlu0 %36
    %vm38 = vcmp.eq.s32.totalorder %v29, %v34
    %vm39 = vcmp.eq.s32.totalorder %v29, %v37
    %v40 = vsel %vm38, 1, 0
    %v41 = vsel %vm39, 1, 0
    %v42 = vcvt.s32.f32 %v40
    %v43 = vcvt.s32.f32 %v41
    %v44 = vld [vmem:[#allocation2] sm:$0xff]
    %v45 = vld [vmem:[#allocation2 + $0x8] sm:$0xff]
    %v46 = vld [vmem:[#allocation2 + $0x10] sm:$0xff]
    %v47 = vld [vmem:[#allocation2 + $0x18] sm:$0xff]
    %v48 = vld [vmem:[#allocation2 + $0x20] sm:$0xff]
    %v49 = vld [vmem:[#allocation2 + $0x28] sm:$0xff]
    %v50 = vld [vmem:[#allocation2 + $0x30] sm:$0xff]
    %v51 = vld [vmem:[#allocation2 + $0x38] sm:$0xff]
    %v52 = vld [vmem:[#allocation2 + $0x40] sm:$0xff]
    %v53 = vld [vmem:[#allocation2 + $0x48] sm:$0xff]
    %v54 = vld [vmem:[#allocation2 + $0x50] sm:$0xff]
    %v55 = vld [vmem:[#allocation2 + $0x58] sm:$0xff]
    %v56 = vld [vmem:[#allocation2 + $0x60] sm:$0xff]
    %v57 = vld [vmem:[#allocation2 + $0x68] sm:$0xff]
    %v58 = vld [vmem:[#allocation2 + $0x70] sm:$0xff]
    %v59 = vld [vmem:[#allocation2 + $0x78] sm:$0xff]
    %60 = vmatpush.msra.mxu0 %v59
    %61 = vmatpush.msra.mxu0 %v58
    %62 = vmatpush.msra.mxu0 %v57
    %63 = vmatpush.msra.mxu0 %v56
    %64 = vmatpush.msra.mxu0 %v55
    %65 = vmatpush.msra.mxu0 %v54
    %66 = vmatpush.msra.mxu0 %v53
    %67 = vmatpush.msra.mxu0 %v52
    %68 = vmatpush.msra.mxu0 %v51
    %69 = vmatpush.msra.mxu0 %v50
    %70 = vmatpush.msra.mxu0 %v49
    %71 = vmatpush.msra.mxu0 %v48
    %72 = vmatpush.msra.mxu0 %v47
    %73 = vmatpush.msra.mxu0 %v46
    %74 = vmatpush.msra.mxu0 %v45
    %75 = vmatpush.msra.mxu0 %v44
    %76 = vmatmul.f32.gmra.mxu0 %v42
    %v77 = vpop.f32.mrf.mxu0
    %v78 = vadd.f32 0.0, %v77
    %79 = vmatmul.f32.gmra.mxu0 %v43
    %v80 = vpop.f32.mrf.mxu0
    %v81 = vadd.f32 0.0, %v80
    %82 = vdwg.mxu0
    %83 = vst [vmem:[#allocation5] sm:$0xff] %v78
    %84 = vst [vmem:[#allocation5 + $0x8] sm:$0xff] %v81
    // Predicated region
    $region14: #{tpu_custom_call.1} parent=1 // pred_check
      _
    $region15: #{tpu_custom_call.1} parent=1 // pred_check_branch
      %86 = sbr.rel (0) target = $region17
    $region16: #{tpu_custom_call.1} parent=1 // pred_region
      %88 = vsyncadd [#allocation4], 0
      %s89 = sshll.u32 [#allocation5], 4
      %s90 = int_to_ptr.vmem [resolvable:$true] %s89
      %s91 = sshll.u32 %s2, 4
      %s92 = int_to_ptr.hbm [resolvable:$true] %s91
      %97 = dma.vmem_to_hbm [thread:$0]  %s90, 256, %s92, [#allocation4], 128, 128, 8
    $region17: #{tpu_custom_call.1} parent=1 // pred_fallthru
      _
    // Predicated region
    $region18: #{tpu_custom_call.1} parent=1 // pred_check
      _
    $region19: #{tpu_custom_call.1} parent=1 // pred_check_branch
      %99 = sbr.rel (0) target = $region21
    $region20: #{tpu_custom_call.1} parent=1 // pred_region
      %101 = dma.done [#allocation4], 256
    $region21: #{tpu_custom_call.1} parent=1 // pred_fallthru
      _
    %102 = vsyncpa [#allocation3], 1
    %103 = vsyncpa [#allocation4], 1

// kernel: tpu_custom_call.1
$region0: #{tpu_custom_call.1}
  #allocation0 [shape = 'u32[]', space=smem, size = 0x4, offset = 0x4, fixed_abs, tag = 'smem constant byte address 0x4 - core index']
  #allocation1 [shape = 'u32[72,128]{1,0:T(1,128)}', space=vmem, size = 0x9000, scoped, tag = 'internal scratch']
  %s0 = inlined_call_operand.vmem [shape: s32[16,1], index: 0, kind: input, shape index: {}]
  %s1 = inlined_call_operand.hbm [shape: f32[128,128], index: 1, kind: input, shape index: {}]
  %s2 = inlined_call_operand.hbm [shape: f32[16,128], index: 2, kind: output, shape index: {}]
  %s3 = sld [smem:[#allocation0]]
  $region22: #{tpu_custom_call.1} parent=0
    _
  %s5 = ssub.s32 1, %s3
  %s6 = scalar_select 0, %s5, %s3
  $region1: #{tpu_custom_call.1} parent=0
    #allocation2 [shape = 'u8[65536]{0}', space=vmem, size = 0x10000, scoped, tag = 'input window, operand 1, single buffered']
    #allocation3 [shape = 's32[1]{0}', space=sflag, size = 0x4, scoped, tag = 'scoped memory for tpu_custom_call.1']
    #allocation4 [shape = 's32[1]{0}', space=sflag, size = 0x4, scoped, tag = 'scoped memory for tpu_custom_call.1']
    #allocation5 [shape = 'u8[8192]{0}', space=vmem, size = 0x2000, scoped, tag = 'output window, operand 0, single buffered']
    %7 = vsyncpa [#allocation3], 0
    %8 = vsyncpa [#allocation4], 0
    // Predicated region
    $region2: #{tpu_custom_call.1} parent=1 // pred_check
      _
    $region3: #{tpu_custom_call.1} parent=1 // pred_check_branch
      %10 = sbr.rel (0) target = $region5
    $region4: #{tpu_custom_call.1} parent=1 // pred_region
      _
    $region5: #{tpu_custom_call.1} parent=1 // pred_fallthru
      _
    // Predicated region
    $region6: #{tpu_custom_call.1} parent=1 // pred_check
      _
    $region7: #{tpu_custom_call.1} parent=1 // pred_check_branch
      %12 = sbr.rel (0) target = $region9
    $region8: #{tpu_custom_call.1} parent=1 // pred_region
      %14 = vsyncadd [#allocation3], 0
      %s15 = sshll.u32 %s1, 4
      %s16 = int_to_ptr.hbm [resolvable:$true] %s15
      %s17 = sshll.u32 [#allocation2], 4
      %s18 = int_to_ptr.vmem [resolvable:$true] %s17
      %23 = dma.hbm_to_vmem [thread:$0]  %s16, 2048, %s18, [#allocation3], 128, 128, 8
    $region9: #{tpu_custom_call.1} parent=1 // pred_fallthru
      _
    // Predicated region
    $region10: #{tpu_custom_call.1} parent=1 // pred_check
      _
    $region11: #{tpu_custom_call.1} parent=1 // pred_check_branch
      %25 = sbr.rel (0) target = $region13
    $region12: #{tpu_custom_call.1} parent=1 // pred_region
      %27 = dma.done [#allocation3], 2048
    $region13: #{tpu_custom_call.1} parent=1 // pred_fallthru
      _
    %v28 = vlaneseq
    %v29 = vand.u32 %v28, 127
    %v30 = vld [vmem:[%s0] sm:$0xff]
    %v31 = vld [vmem:[%s0 + $0x8] sm:$0xff]
    %32 = vset.pattern.permute.xlu0 0
    %33 = vperm.xlu0 %32, %v30
    %v34 = vpop.permute.xlu0 %33
    %35 = vset.pattern.permute.xlu0 0
    %36 = vperm.xlu0 %35, %v31
    %v37 = vpop.permute.xlu0 %36
    %vm38 = vcmp.eq.s32.totalorder %v29, %v34
    %vm39 = vcmp.eq.s32.totalorder %v29, %v37
    %v40 = vsel %vm38, 1, 0
    %v41 = vsel %vm39, 1, 0
    %v42 = vcvt.s32.f32 %v40
    %v43 = vcvt.s32.f32 %v41
    %v44 = vld [vmem:[#allocation2] sm:$0xff]
    %v45 = vld [vmem:[#allocation2 + $0x8] sm:$0xff]
    %v46 = vld [vmem:[#allocation2 + $0x10] sm:$0xff]
    %v47 = vld [vmem:[#allocation2 + $0x18] sm:$0xff]
    %v48 = vld [vmem:[#allocation2 + $0x20] sm:$0xff]
    %v49 = vld [vmem:[#allocation2 + $0x28] sm:$0xff]
    %v50 = vld [vmem:[#allocation2 + $0x30] sm:$0xff]
    %v51 = vld [vmem:[#allocation2 + $0x38] sm:$0xff]
    %v52 = vld [vmem:[#allocation2 + $0x40] sm:$0xff]
    %v53 = vld [vmem:[#allocation2 + $0x48] sm:$0xff]
    %v54 = vld [vmem:[#allocation2 + $0x50] sm:$0xff]
    %v55 = vld [vmem:[#allocation2 + $0x58] sm:$0xff]
    %v56 = vld [vmem:[#allocation2 + $0x60] sm:$0xff]
    %v57 = vld [vmem:[#allocation2 + $0x68] sm:$0xff]
    %v58 = vld [vmem:[#allocation2 + $0x70] sm:$0xff]
    %v59 = vld [vmem:[#allocation2 + $0x78] sm:$0xff]
    %60 = vmatpush.msra.mxu0 %v59
    %61 = vmatpush.msra.mxu0 %v58
    %62 = vmatpush.msra.mxu0 %v57
    %63 = vmatpush.msra.mxu0 %v56
    %64 = vmatpush.msra.mxu0 %v55
    %65 = vmatpush.msra.mxu0 %v54
    %66 = vmatpush.msra.mxu0 %v53
    %67 = vmatpush.msra.mxu0 %v52
    %68 = vmatpush.msra.mxu0 %v51
    %69 = vmatpush.msra.mxu0 %v50
    %70 = vmatpush.msra.mxu0 %v49
    %71 = vmatpush.msra.mxu0 %v48
    %72 = vmatpush.msra.mxu0 %v47
    %73 = vmatpush.msra.mxu0 %v46
    %74 = vmatpush.msra.mxu0 %v45
    %75 = vmatpush.msra.mxu0 %v44
    %76 = vmatmul.f32.gmra.mxu0 %v42
    %v77 = vpop.f32.mrf.mxu0
    %v78 = vadd.f32 0.0, %v77
    %79 = vmatmul.f32.gmra.mxu0 %v43
    %v80 = vpop.f32.mrf.mxu0
    %v81 = vadd.f32 0.0, %v80
    %82 = vdwg.mxu0
    %83 = vst [vmem:[#allocation5] sm:$0xff] %v78
    %84 = vst [vmem:[#allocation5 + $0x8] sm:$0xff] %v81
    // Predicated region
    $region14: #{tpu_custom_call.1} parent=1 // pred_check
      _
    $region15: #{tpu_custom_call.1} parent=1 // pred_check_branch
      %86 = sbr.rel (0) target = $region17
    $region16: #{tpu_custom_call.1} parent=1 // pred_region
      %88 = vsyncadd [#allocation4], 0
      %s89 = sshll.u32 [#allocation5], 4
      %s90 = int_to_ptr.vmem [resolvable:$true] %s89
      %s91 = sshll.u32 %s2, 4
      %s92 = int_to_ptr.hbm [resolvable:$true] %s91
      %97 = dma.vmem_to_hbm [thread:$0]  %s90, 256, %s92, [#allocation4], 128, 128, 8
    $region17: #{tpu_custom_call.1} parent=1 // pred_fallthru
      _
    // Predicated region
    $region18: #{tpu_custom_call.1} parent=1 // pred_check
      _
    $region19: #{tpu_custom_call.1} parent=1 // pred_check_branch
      %99 = sbr.rel (0) target = $region21
    $region20: #{tpu_custom_call.1} parent=1 // pred_region
      %101 = dma.done [#allocation4], 256
    $region21: #{tpu_custom_call.1} parent=1 // pred_fallthru
      _
    %102 = vsyncpa [#allocation3], 1
    %103 = vsyncpa [#allocation4], 1

</llo_original>
